<compile_context>
chip_gen: v7x
topology: tpu7x:2x2x1
jax: 0.10.0
libtpu: 0.0.40
codegen_flags: <defaults>
</compile_context>

<pallas_src>
import jax
import jax.numpy as jnp
from jax.experimental import pallas as pl
from jax.experimental.pallas import tpu as pltpu


def _choose_sublane_tile(s, c, x_itemsize, t_itemsize,
                         combined_target_bytes=2 << 20):
    """Pick the sublane-row tile `ts` for (C, ts, 128) blocks.

    One grid step moves c*128*ts*(x_itemsize + t_itemsize) input bytes; keep
    that near ~2 MiB (big enough to amortize the ~0.35us per-step overhead,
    small enough that the double-buffered footprint is a few MiB on v5e's
    16 MiB scoped-VMEM default).  This layout has no sublane padding, so the
    accounting is exact.  Returns either a multiple of 8 or the full extent.
    """
    cap = combined_target_bytes // (c * 128 * (x_itemsize + t_itemsize))
    cap = max(8, (cap // 8) * 8)
    if cap >= s:
        return s
    return cap


def _make_fscore_kernel(s, ts):
    """Build the per-(batch, pixel-chunk) kernel and its partial-output rows.

    Block layout is (C, ts, 128): channels on the leading (plane) axis, pixel
    rows on sublanes, pixels dense on the 128 lanes.  Channel reductions are
    elementwise VPU combines across the C planes.
    """
    mask_tail = (s % ts) != 0

    if ts % 8 == 0:
        rows_out = 8

        def _fold(v):  # (ts,128) -> (8,128): free sublane-group reshape + VPU adds
            return v.reshape(ts // 8, 8, 128).sum(axis=0)
    else:
        # Only possible when ts == s (tiny spatial extents); keep partials as-is.
        rows_out = ts

        def _fold(v):
            return v

    def kernel(x_ref, t_ref, su_ref, st_ref):
        x = x_ref[...].astype(jnp.float32)            # (C, ts, 128)
        t = t_ref[...].astype(jnp.float32)            # (C, ts, 128)

        if mask_tail:
            # Ragged final chunk: rows past the array end hold garbage; zero
            # them so they contribute nothing (and cannot inject NaN/Inf).
            rows_left = s - pl.program_id(1) * ts
            row_idx = jax.lax.broadcasted_iota(jnp.int32, (ts, 128), 0)
            valid = row_idx < rows_left
            x = jnp.where(valid, x, 0.0)
            t = jnp.where(valid, t, 0.0)

        # Numerically stable softmax over channels.  Only the per-pixel
        # sum_c(softmax * t) = sum_c(e*t) / sum_c(e) is needed: one reciprocal
        # per pixel, the softmax matrix is never materialized.
        m = jnp.max(x, axis=0)                        # (ts,128)   VPU across C planes
        e = jnp.exp(x - m)                            # (C,ts,128) EUP
        num = jnp.sum(e * t, axis=0)                  # (ts,128)
        den = jnp.sum(e, axis=0)                      # (ts,128)
        su = num * pl.reciprocal(den, approx=False)   # exact; kernel is HBM-bound
        st = jnp.sum(t, axis=0)                       # (ts,128)

        su_ref[...] = _fold(su)
        st_ref[...] = _fold(st)

    return kernel, rows_out


def fscore_loss(x, target, class_weights, f1_weight):
    """JAX/Pallas equivalent of FscoreLoss.forward(input, target).

    x, target: (N, C, H, W); target may be any dtype (bf16/int8 targets halve
    their HBM traffic; the kernel upcasts to f32 on load).  Returns shape (1,).
    """
    n, c, h, w = x.shape
    hw = h * w

    # Free channel-major reshapes: no transpose, no extra HBM pass.
    x3 = x.reshape(n, c, hw)
    t3 = target.reshape(n, c, hw)

    # Rare path: pixel count not a multiple of 128 -> zero-pad the pixel axis
    # (one extra HBM pass only in this case).  Zero logits give a finite
    # softmax and zero targets contribute nothing to either accumulated sum,
    # so the padding is inert; sum(softmax) below uses the REAL pixel count.
    pad = (-hw) % 128
    if pad:
        x3 = jnp.pad(x3, ((0, 0), (0, 0), (0, pad)))
        t3 = jnp.pad(t3, ((0, 0), (0, 0), (0, pad)))
    s = (hw + pad) // 128
    x4 = x3.reshape(n, c, s, 128)
    t4 = t3.reshape(n, c, s, 128)

    ts = _choose_sublane_tile(s, c,
                              jnp.dtype(x.dtype).itemsize,
                              jnp.dtype(target.dtype).itemsize)
    j_steps = pl.cdiv(s, ts)

    kernel, rows_out = _make_fscore_kernel(s, ts)
    part_shape = jax.ShapeDtypeStruct((n, j_steps, rows_out, 128), jnp.float32)

    su_part, st_part = pl.pallas_call(
        kernel,
        out_shape=(part_shape, part_shape),
        grid_spec=pltpu.PrefetchScalarGridSpec(
            num_scalar_prefetch=0,
            grid=(n, j_steps),
            in_specs=[
                pl.BlockSpec((None, c, ts, 128), lambda b, j: (b, 0, j, 0)),
                pl.BlockSpec((None, c, ts, 128), lambda b, j: (b, 0, j, 0)),
            ],
            out_specs=(
                pl.BlockSpec((None, None, rows_out, 128),
                             lambda b, j: (b, j, 0, 0)),
                pl.BlockSpec((None, None, rows_out, 128),
                             lambda b, j: (b, j, 0, 0)),
            ),
        ),
        compiler_params=pltpu.CompilerParams(
            dimension_semantics=("parallel", "parallel")),
    )(x4, t4)

    su = jnp.sum(su_part)              # sum(softmax(input) * target)
    st = jnp.sum(st_part)              # sum(target)
    si = jnp.float32(n * hw)           # sum(softmax(input)) == #pixels exactly

    beta = jnp.float32(f1_weight)
    r = su / (st + 1e-07)              # recall
    p = su / (si + 1e-07)              # precision
    # No 0/0 guard: matches the PyTorch module, which yields NaN when su == 0.
    f1 = (1.0 + beta ** 2) * r * p / (r + p * beta ** 2)

    # Matches the PyTorch loop: same f1 every iteration, scaled by each weight.
    score = jnp.zeros((1,), jnp.float32)
    for cw in class_weights:
        score = score + (1.0 - f1) * cw
    return score


if __name__ == "__main__":
    key = jax.random.PRNGKey(0)
    n, c, h, w = 2, 4, 32, 32
    k1, k2 = jax.random.split(key)

    # Deterministic synthetic inputs: f32 logits + bf16 one-hot targets (NCHW).
    # 0/1 values are exact in bf16 and halve the target HBM traffic.
    x = jax.random.normal(k1, (n, c, h, w), dtype=jnp.float32)
    labels = jax.random.randint(k2, (n, h, w), 0, c)
    target = jnp.transpose(jax.nn.one_hot(labels, c, dtype=jnp.bfloat16),
                           (0, 3, 1, 2))

    # Deterministic "module parameters" (FscoreLoss.__init__ args).
    class_weights = [0.1, 0.2, 0.3, 0.4]
    f1_weight = 1.0

    out = jax.block_until_ready(
        fscore_loss(x, target, class_weights, f1_weight))

    # Pure-JAX reference (mirrors the PyTorch module exactly).
    sm = jax.nn.softmax(x, axis=1)
    tf = target.astype(jnp.float32)
    su = jnp.sum(sm * tf)
    si = jnp.sum(sm)
    st = jnp.sum(tf)
    r = su / (st + 1e-07)
    p = su / (si + 1e-07)
    f1 = (1.0 + f1_weight ** 2) * r * p / (r + p * f1_weight ** 2)
    ref = jnp.zeros((1,), jnp.float32)
    for cw in class_weights:
        ref = ref + (1.0 - f1) * cw

    assert out.shape == (1,)
    assert jnp.allclose(out, ref, atol=1e-5, rtol=1e-4), (out, ref)
    print("KERNEL_OK")
</pallas_src>

<mosaic_0001>
module attributes {stable_mosaic.version = 11 : i64} {
  func.func @kernel(%arg0: i32, %arg1: i32, %arg2: memref<1x4x8x128xf32, #tpu.memory_space<vmem>>, %arg3: memref<1x4x8x128xbf16, #tpu.memory_space<vmem>>, %arg4: memref<1x1x8x128xf32, #tpu.memory_space<vmem>>, %arg5: memref<1x1x8x128xf32, #tpu.memory_space<vmem>>) attributes {dimension_semantics = [#tpu.dimension_semantics<parallel>, #tpu.dimension_semantics<parallel>], iteration_bounds = array<i64: 2, 1>, scalar_prefetch = 0 : i64, scratch_operands = 0 : i64, tpu.core_type = #tpu.core_type<tc>, window_params = [{transform_indices = @transform_0, window_bounds = array<i64: 1, 4, 8, 128>}, {transform_indices = @transform_1, window_bounds = array<i64: 1, 4, 8, 128>}, {transform_indices = @transform_2, window_bounds = array<i64: 1, 1, 8, 128>}, {transform_indices = @transform_3, window_bounds = array<i64: 1, 1, 8, 128>}]} {
    %c0 = arith.constant 0 : index
    %c0_0 = arith.constant 0 : index
    %c0_1 = arith.constant 0 : index
    %c0_2 = arith.constant 0 : index
    %0 = vector.load %arg2[%c0, %c0_0, %c0_1, %c0_2] : memref<1x4x8x128xf32, #tpu.memory_space<vmem>>, vector<1x4x8x128xf32>
    %1 = vector.shape_cast %0 : vector<1x4x8x128xf32> to vector<4x8x128xf32>
    %c0_3 = arith.constant 0 : index
    %c0_4 = arith.constant 0 : index
    %c0_5 = arith.constant 0 : index
    %c0_6 = arith.constant 0 : index
    %2 = vector.load %arg3[%c0_3, %c0_4, %c0_5, %c0_6] : memref<1x4x8x128xbf16, #tpu.memory_space<vmem>>, vector<1x4x8x128xbf16>
    %3 = vector.shape_cast %2 : vector<1x4x8x128xbf16> to vector<4x8x128xbf16>
    %4 = arith.extf %3 : vector<4x8x128xbf16> to vector<4x8x128xf32>
    %cst = arith.constant dense<0xFF800000> : vector<8x128xf32>
    %5 = vector.multi_reduction <maximumf>, %1, %cst [0] : vector<4x8x128xf32> to vector<8x128xf32>
    %6 = vector.shape_cast %5 : vector<8x128xf32> to vector<1x8x128xf32>
    %7 = vector.broadcast %6 : vector<1x8x128xf32> to vector<4x8x128xf32>
    %8 = arith.subf %1, %7 : vector<4x8x128xf32>
    %9 = math.exp %8 : vector<4x8x128xf32>
    %10 = arith.mulf %9, %4 : vector<4x8x128xf32>
    %cst_7 = arith.constant dense<0.000000e+00> : vector<8x128xf32>
    %11 = vector.multi_reduction <add>, %10, %cst_7 [0] : vector<4x8x128xf32> to vector<8x128xf32>
    %cst_8 = arith.constant dense<0.000000e+00> : vector<8x128xf32>
    %12 = vector.multi_reduction <add>, %9, %cst_8 [0] : vector<4x8x128xf32> to vector<8x128xf32>
    %13 = tpu.reciprocal %12 : vector<8x128xf32> -> vector<8x128xf32>
    %14 = arith.mulf %11, %13 : vector<8x128xf32>
    %cst_9 = arith.constant dense<0.000000e+00> : vector<8x128xf32>
    %15 = vector.multi_reduction <add>, %4, %cst_9 [0] : vector<4x8x128xf32> to vector<8x128xf32>
    %16 = vector.shape_cast %14 : vector<8x128xf32> to vector<1x8x128xf32>
    %cst_10 = arith.constant dense<0.000000e+00> : vector<8x128xf32>
    %17 = vector.multi_reduction <add>, %16, %cst_10 [0] : vector<1x8x128xf32> to vector<8x128xf32>
    %c0_11 = arith.constant 0 : index
    %c0_12 = arith.constant 0 : index
    %c0_13 = arith.constant 0 : index
    %c0_14 = arith.constant 0 : index
    %18 = vector.load %arg4[%c0_11, %c0_12, %c0_13, %c0_14] : memref<1x1x8x128xf32, #tpu.memory_space<vmem>>, vector<1x1x8x128xf32>
    %19 = vector.shape_cast %18 : vector<1x1x8x128xf32> to vector<8x128xf32>
    %20 = vector.shape_cast %17 : vector<8x128xf32> to vector<1x1x8x128xf32>
    tpu.vector_store %arg4[%c0_11, %c0_12, %c0_13, %c0_14], %20 {strides = array<i32>} : memref<1x1x8x128xf32, #tpu.memory_space<vmem>>, vector<1x1x8x128xf32>,
    %21 = vector.shape_cast %15 : vector<8x128xf32> to vector<1x8x128xf32>
    %cst_15 = arith.constant dense<0.000000e+00> : vector<8x128xf32>
    %22 = vector.multi_reduction <add>, %21, %cst_15 [0] : vector<1x8x128xf32> to vector<8x128xf32>
    %c0_16 = arith.constant 0 : index
    %c0_17 = arith.constant 0 : index
    %c0_18 = arith.constant 0 : index
    %c0_19 = arith.constant 0 : index
    %23 = vector.load %arg5[%c0_16, %c0_17, %c0_18, %c0_19] : memref<1x1x8x128xf32, #tpu.memory_space<vmem>>, vector<1x1x8x128xf32>
    %24 = vector.shape_cast %23 : vector<1x1x8x128xf32> to vector<8x128xf32>
    %25 = vector.shape_cast %22 : vector<8x128xf32> to vector<1x1x8x128xf32>
    tpu.vector_store %arg5[%c0_16, %c0_17, %c0_18, %c0_19], %25 {strides = array<i32>} : memref<1x1x8x128xf32, #tpu.memory_space<vmem>>, vector<1x1x8x128xf32>,
    return
  }
  func.func @transform_0(%arg0: i32, %arg1: i32) -> (i32, i32, i32, i32) {
    %c0_i32 = arith.constant 0 : i32
    %c0_i32_0 = arith.constant 0 : i32
    %c0_i32_1 = arith.constant 0 : i32
    return %arg0, %c0_i32, %arg1, %c0_i32_0 : i32, i32, i32, i32
  }
  func.func @transform_1(%arg0: i32, %arg1: i32) -> (i32, i32, i32, i32) {
    %c0_i32 = arith.constant 0 : i32
    %c0_i32_0 = arith.constant 0 : i32
    %c0_i32_1 = arith.constant 0 : i32
    return %arg0, %c0_i32, %arg1, %c0_i32_0 : i32, i32, i32, i32
  }
  func.func @transform_2(%arg0: i32, %arg1: i32) -> (i32, i32, i32, i32) {
    %c0_i32 = arith.constant 0 : i32
    %c0_i32_0 = arith.constant 0 : i32
    %c0_i32_1 = arith.constant 0 : i32
    return %arg0, %arg1, %c0_i32, %c0_i32_0 : i32, i32, i32, i32
  }
  func.func @transform_3(%arg0: i32, %arg1: i32) -> (i32, i32, i32, i32) {
    %c0_i32 = arith.constant 0 : i32
    %c0_i32_0 = arith.constant 0 : i32
    %c0_i32_1 = arith.constant 0 : i32
    return %arg0, %arg1, %c0_i32, %c0_i32_0 : i32, i32, i32, i32
  }
}

</mosaic_0001>

<llo_original>
// kernel: tpu_custom_call.1
$region0: #{tpu_custom_call.1}
  #allocation0 [shape = 'u32[]', space=smem, size = 0x4, offset = 0x4, fixed_abs, tag = 'smem constant byte address 0x4 - core index']
  #allocation1 [shape = 'u32[144,128]{1,0:T(1,128)}', space=vmem, size = 0x12000, scoped, tag = 'internal scratch']
  %s0 = inlined_call_operand.hbm [shape: f32[2,4,8,128], index: 0, kind: input, shape index: {}]
  %s1 = inlined_call_operand.hbm [shape: bf16[2,4,8,128], index: 1, kind: input, shape index: {}]
  %s2 = inlined_call_operand.hbm [shape: f32[2,1,8,128], index: 2, kind: output, shape index: {0}]
  %s3 = inlined_call_operand.hbm [shape: f32[2,1,8,128], index: 3, kind: output, shape index: {1}]
  %4 = xla_tuple %s2, %s3
  %s5 = sld [smem:[#allocation0]]
  $region57: #{tpu_custom_call.1} parent=0
    _
  %s7 = ssub.s32 1, %s5
  %s8 = scalar_select 0, %s7, %s5
  $region1: #{tpu_custom_call.1} parent=0
    #allocation2 [shape = 'u8[32768]{0}', space=vmem, size = 0x8000, scoped, tag = 'input window, operand 0']
    #allocation3 [shape = 's32[2]{0}', space=sflag, size = 0x8, scoped, tag = 'scoped memory for tpu_custom_call.1']
    #allocation4 [shape = 's32[2]{0}', space=sflag, size = 0x8, scoped, tag = 'scoped memory for tpu_custom_call.1']
    #allocation5 [shape = 'u8[16384]{0}', space=vmem, size = 0x4000, scoped, tag = 'input window, operand 1']
    #allocation6 [shape = 's32[2]{0}', space=sflag, size = 0x8, scoped, tag = 'scoped memory for tpu_custom_call.1']
    #allocation7 [shape = 'u8[8192]{0}', space=vmem, size = 0x2000, scoped, tag = 'output window, operand 0']
    #allocation8 [shape = 'u8[8192]{0}', space=vmem, size = 0x2000, scoped, tag = 'output window, operand 1']
    #allocation9 [shape = 's32[2]{0}', space=sflag, size = 0x8, scoped, tag = 'scoped memory for tpu_custom_call.1']
    %9 = vsyncpa [#allocation3], 0
    %s10 = scalar_lea.sflag [#allocation3], 1
    %11 = vsyncpa %s10, 0
    %12 = vsyncpa [#allocation6], 0
    %s13 = scalar_lea.sflag [#allocation6], 1
    %14 = vsyncpa %s13, 0
    %15 = vsyncpa [#allocation4], 0
    %s16 = scalar_lea.sflag [#allocation4], 1
    %17 = vsyncpa %s16, 0
    %18 = vsyncpa [#allocation9], 0
    %s19 = scalar_lea.sflag [#allocation9], 1
    %20 = vsyncpa %s19, 0
    loop: start=0, step=1, limit=4
    $region2: #{tpu_custom_call.1} parent=1 // loop_pre_header
      _
    $region3: #{tpu_custom_call.1} parent=1 // loop_header
      %s22 = sphi 0, %s26
      %p23 = scmp.ge.s32.totalorder %s22, 4
      %s29 = sphi 0, %s41
      %s30 = sphi 0, %s37
      %s31 = sphi 0, %s29
      %s32 = sphi 0, %s30
      %s33 = sphi 0, %s31
      %s34 = sphi 0, %s32
      %s46 = sphi 0, %s48
      %s49 = sphi 0, %s46
      %s50 = sphi 0, %s49
      %s66 = sphi 0, %s50
      %s74 = sphi 0, %s76
      %s77 = sphi 0, %s74
      %s78 = sphi 0, %s77
      %s94 = sphi 0, %s78
      %s102 = sphi 0, %s104
      %s105 = sphi 0, %s102
      %s106 = sphi 0, %s105
      %s122 = sphi 0, %s106
      %s130 = sphi 0, %s132
      %s133 = sphi 0, %s130
      %s134 = sphi 0, %s133
      %s150 = sphi 0, %s134
    $region4: #{tpu_custom_call.1} parent=1 // loop_header_branch
      %25 = sbr.rel (%p23) target = $region8
    $region5: #{tpu_custom_call.1} parent=1 // loop_body
      %s27 = ssub.s32 %s22, 1
      %s28 = ssub.s32 %s22, 2
      %s35 = sadd.s32 1, %s30
      %p36 = scmp.ge.s32.totalorder %s35, 1
      %s37 = scalar_select %p36, 0, %s35
      %s38 = sadd.s32 1, %s29
      %s39 = scalar_select %p36, %s38, %s29
      %p40 = scmp.ge.s32.totalorder %s39, 2
      %s41 = scalar_select %p40, 0, %s39
      %s42 = ssub.s32 %s29, %s41
      %s43 = ssub.s32 %s30, %s37
      %s44 = sor.u32 %s42, %s43
      %p45 = scmp.eq.s32.totalorder %s44, 0
      %s47 = sadd.s32 %s46, 1
      %s48 = scalar_select %p45, %s46, %s47
      %p51 = pneg %p45
      %p52 = scmp.eq.s32.totalorder %s22, 1
      %p53 = por %p51, %p52
      %p54 = scmp.ne.s32.totalorder %s46, %s49
      %p55 = scmp.eq.s32.totalorder %s22, 0
      %p56 = por %p54, %p55
      %p57 = scmp.ne.s32.totalorder %s46, %s49
      %p58 = scmp.eq.s32.totalorder %s27, 1
      %p59 = por %p57, %p58
      %p60 = scmp.ne.s32.totalorder %s49, %s50
      %p61 = scmp.eq.s32.totalorder %s27, 0
      %p62 = por %p60, %p61
      %p63 = scmp.ne.s32.totalorder %s49, %s50
      %p64 = scmp.eq.s32.totalorder %s28, 1
      %p65 = por %p63, %p64
      %p67 = scmp.ne.s32.totalorder %s50, %s66
      %p68 = scmp.eq.s32.totalorder %s28, 0
      %p69 = por %p67, %p68
      %s70 = ssub.s32 %s29, %s41
      %s71 = ssub.s32 %s30, %s37
      %s72 = sor.u32 %s70, %s71
      %p73 = scmp.eq.s32.totalorder %s72, 0
      %s75 = sadd.s32 %s74, 1
      %s76 = scalar_select %p73, %s74, %s75
      %p79 = pneg %p73
      %p80 = scmp.eq.s32.totalorder %s22, 1
      %p81 = por %p79, %p80
      %p82 = scmp.ne.s32.totalorder %s74, %s77
      %p83 = scmp.eq.s32.totalorder %s22, 0
      %p84 = por %p82, %p83
      %p85 = scmp.ne.s32.totalorder %s74, %s77
      %p86 = scmp.eq.s32.totalorder %s27, 1
      %p87 = por %p85, %p86
      %p88 = scmp.ne.s32.totalorder %s77, %s78
      %p89 = scmp.eq.s32.totalorder %s27, 0
      %p90 = por %p88, %p89
      %p91 = scmp.ne.s32.totalorder %s77, %s78
      %p92 = scmp.eq.s32.totalorder %s28, 1
      %p93 = por %p91, %p92
      %p95 = scmp.ne.s32.totalorder %s78, %s94
      %p96 = scmp.eq.s32.totalorder %s28, 0
      %p97 = por %p95, %p96
      %s98 = ssub.s32 %s29, %s41
      %s99 = ssub.s32 %s30, %s37
      %s100 = sor.u32 %s98, %s99
      %p101 = scmp.eq.s32.totalorder %s100, 0
      %s103 = sadd.s32 %s102, 1
      %s104 = scalar_select %p101, %s102, %s103
      %p107 = pneg %p101
      %p108 = scmp.eq.s32.totalorder %s22, 1
      %p109 = por %p107, %p108
      %p110 = scmp.ne.s32.totalorder %s102, %s105
      %p111 = scmp.eq.s32.totalorder %s22, 0
      %p112 = por %p110, %p111
      %p113 = scmp.ne.s32.totalorder %s102, %s105
      %p114 = scmp.eq.s32.totalorder %s27, 1
      %p115 = por %p113, %p114
      %p116 = scmp.ne.s32.totalorder %s105, %s106
      %p117 = scmp.eq.s32.totalorder %s27, 0
      %p118 = por %p116, %p117
      %p119 = scmp.ne.s32.totalorder %s105, %s106
      %p120 = scmp.eq.s32.totalorder %s28, 1
      %p121 = por %p119, %p120
      %p123 = scmp.ne.s32.totalorder %s106, %s122
      %p124 = scmp.eq.s32.totalorder %s28, 0
      %p125 = por %p123, %p124
      %s126 = ssub.s32 %s29, %s41
      %s127 = ssub.s32 %s30, %s37
      %s128 = sor.u32 %s126, %s127
      %p129 = scmp.eq.s32.totalorder %s128, 0
      %s131 = sadd.s32 %s130, 1
      %s132 = scalar_select %p129, %s130, %s131
      %p135 = pneg %p129
      %p136 = scmp.eq.s32.totalorder %s22, 1
      %p137 = por %p135, %p136
      %p138 = scmp.ne.s32.totalorder %s130, %s133
      %p139 = scmp.eq.s32.totalorder %s22, 0
      %p140 = por %p138, %p139
      %p141 = scmp.ne.s32.totalorder %s130, %s133
      %p142 = scmp.eq.s32.totalorder %s27, 1
      %p143 = por %p141, %p142
      %p144 = scmp.ne.s32.totalorder %s133, %s134
      %p145 = scmp.eq.s32.totalorder %s27, 0
      %p146 = por %p144, %p145
      %p147 = scmp.ne.s32.totalorder %s133, %s134
      %p148 = scmp.eq.s32.totalorder %s28, 1
      %p149 = por %p147, %p148
      %p151 = scmp.ne.s32.totalorder %s134, %s150
      %p152 = scmp.eq.s32.totalorder %s28, 0
      %p153 = por %p151, %p152
      %p154 = scmp.le.s32.totalorder 1, %s22
      %p155 = scmp.lt.s32.totalorder %s22, 3
      %p156 = pnand %p154, %p155
      %p157 = pneg %p156
      // Predicated region
      $region9: #{tpu_custom_call.1} parent=5 // pred_check
        _
      $region10: #{tpu_custom_call.1} parent=5 // pred_check_branch
        %159 = sbr.rel (%p156) target = $region12
      $region11: #{tpu_custom_call.1} parent=5 // pred_region
        %s160 = ssub.s32 %s22, 1
      $region12: #{tpu_custom_call.1} parent=5 // pred_fallthru
        _
      %p161 = scmp.lt.s32.totalorder %s22, 2
      // Predicated region
      $region13: #{tpu_custom_call.1} parent=5 // pred_check
        %p162 = pneg %p161
      $region14: #{tpu_custom_call.1} parent=5 // pred_check_branch
        %164 = sbr.rel (%p162) target = $region16
      $region15: #{tpu_custom_call.1} parent=5 // pred_region
        // Predicated region
        $region17: #{tpu_custom_call.1} parent=15 // pred_check
          %p165 = pneg %p56
        $region18: #{tpu_custom_call.1} parent=15 // pred_check_branch
          %167 = sbr.rel (%p165) target = $region20
        $region19: #{tpu_custom_call.1} parent=15 // pred_region
          %s168 = sand.u32 %s46, 1
          %s169 = scalar_lea.sflag [#allocation3], %s168
          %s170 = sand.u32 %s46, 1
          %s171 = smul.addr %s170, 32
          %s172 = scalar_lea.vmem [#allocation2], %s171
          %s174 = ssub.s32 512, 512
          %175 = vsyncadd %s169, %s174
          %s176 = smul.addr %s29, 4
          %s177 = sadd.s32 %s30, %s176
          %s178 = smul.addr %s177, 128
          %s179 = scalar_lea.hbm %s0, %s178
          %s180 = sshll.u32 %s172, 4
          %s181 = int_to_ptr.vmem [resolvable:$true] %s180
          %186 = dma.hbm_to_vmem [thread:$0]  %s179, 512, %s181, %s169, 128, 128, 8
        $region20: #{tpu_custom_call.1} parent=15 // pred_fallthru
          _
        // Predicated region
        $region21: #{tpu_custom_call.1} parent=15 // pred_check
          %p187 = pneg %p84
        $region22: #{tpu_custom_call.1} parent=15 // pred_check_branch
          %189 = sbr.rel (%p187) target = $region24
        $region23: #{tpu_custom_call.1} parent=15 // pred_region
          %s190 = sand.u32 %s74, 1
          %s191 = scalar_lea.sflag [#allocation6], %s190
          %s192 = sand.u32 %s74, 1
          %s193 = smul.addr %s192, 16
          %s194 = scalar_lea.vmem [#allocation5], %s193
          %s196 = ssub.s32 256, 256
          %197 = vsyncadd %s191, %s196
          %s198 = smul.addr %s29, 4
          %s199 = sadd.s32 %s30, %s198
          %s200 = smul.addr %s199, 64
          %s201 = scalar_lea.hbm %s1, %s200
          %s202 = sshll.u32 %s194, 4
          %s203 = int_to_ptr.vmem [resolvable:$true] %s202
          %208 = dma.hbm_to_vmem [thread:$0]  %s201, 256, %s203, %s191, 64, 64, 4
        $region24: #{tpu_custom_call.1} parent=15 // pred_fallthru
          _
      $region16: #{tpu_custom_call.1} parent=5 // pred_fallthru
        _
      %p209 = scmp.le.s32.totalorder 1, %s22
      %p210 = scmp.lt.s32.totalorder %s22, 3
      %p211 = pnand %p209, %p210
      %p212 = pneg %p211
      // Predicated region
      $region25: #{tpu_custom_call.1} parent=5 // pred_check
        _
      $region26: #{tpu_custom_call.1} parent=5 // pred_check_branch
        %214 = sbr.rel (%p211) target = $region28
      $region27: #{tpu_custom_call.1} parent=5 // pred_region
        %s215 = ssub.s32 %s22, 1
        %s216 = sand.u32 %s49, 1
        %s217 = scalar_lea.sflag [#allocation3], %s216
        %s218 = sand.u32 %s49, 1
        %s219 = smul.addr %s218, 32
        %s220 = scalar_lea.vmem [#allocation2], %s219
        // Predicated region
        $region29: #{tpu_custom_call.1} parent=27 // pred_check
          %p221 = pneg %p62
        $region30: #{tpu_custom_call.1} parent=27 // pred_check_branch
          %223 = sbr.rel (%p221) target = $region32
        $region31: #{tpu_custom_call.1} parent=27 // pred_region
          %224 = dma.done %s217, 512
        $region32: #{tpu_custom_call.1} parent=27 // pred_fallthru
          _
        %s225 = sand.u32 %s77, 1
        %s226 = scalar_lea.sflag [#allocation6], %s225
        %s227 = sand.u32 %s77, 1
        %s228 = smul.addr %s227, 16
        %s229 = scalar_lea.vmem [#allocation5], %s228
        // Predicated region
        $region33: #{tpu_custom_call.1} parent=27 // pred_check
          %p230 = pneg %p90
        $region34: #{tpu_custom_call.1} parent=27 // pred_check_branch
          %232 = sbr.rel (%p230) target = $region36
        $region35: #{tpu_custom_call.1} parent=27 // pred_region
          %233 = dma.done %s226, 256
        $region36: #{tpu_custom_call.1} parent=27 // pred_fallthru
          _
        %s234 = sand.u32 %s49, 1
        %s235 = scalar_lea.sflag [#allocation3], %s234
        %s236 = sand.u32 %s49, 1
        %s237 = smul.addr %s236, 32
        %s238 = scalar_lea.vmem [#allocation2], %s237
        %p239 = pneg %p62
        %p240 = pneg %p59
        %s241 = sand.u32 %s77, 1
        %s242 = scalar_lea.sflag [#allocation6], %s241
        %s243 = sand.u32 %s77, 1
        %s244 = smul.addr %s243, 16
        %s245 = scalar_lea.vmem [#allocation5], %s244
        %p246 = pneg %p90
        %p247 = pneg %p87
        %p248 = pneg %p118
        %p249 = pneg %p115
        %s250 = sand.u32 %s105, 1
        %s251 = scalar_lea.sflag [#allocation4], %s250
        %s252 = sand.u32 %s105, 1
        %s253 = smul.addr %s252, 8
        %s254 = scalar_lea.vmem [#allocation7], %s253
        %p255 = pneg %p146
        %p256 = pneg %p143
        %s257 = sand.u32 %s133, 1
        %s258 = scalar_lea.sflag [#allocation9], %s257
        %s259 = sand.u32 %s133, 1
        %s260 = smul.addr %s259, 8
        %s261 = scalar_lea.vmem [#allocation8], %s260
        %v262 = vld [vmem:[%s220] sm:$0xff]
        %v263 = vld [vmem:[%s220 + $0x8] sm:$0xff]
        %v264 = vld [vmem:[%s220 + $0x10] sm:$0xff]
        %v265 = vld [vmem:[%s220 + $0x18] sm:$0xff]
        %v266 = vld [vmem:[%s229] sm:$0xf]
        %v267 = vld [vmem:[%s229 + $0x4] sm:$0xf]
        %v268 = vld [vmem:[%s229 + $0x8] sm:$0xf]
        %v269 = vld [vmem:[%s229 + $0xc] sm:$0xf]
        %v270 = vunpack.c.l.bf16 %v266
        %v271 = vunpack.c.l.bf16 %v267
        %v272 = vunpack.c.l.bf16 %v268
        %v273 = vunpack.c.l.bf16 %v269
        %v274 = vmax.f32 %v262, %v263
        %v275 = vmax.f32 %v264, %v265
        %v276 = vmax.f32 %v274, %v275
        %v277 = vsub.f32 %v262, %v276
        %v278 = vsub.f32 %v263, %v276
        %v279 = vsub.f32 %v264, %v276
        %v280 = vsub.f32 %v265, %v276
        %v281 = vmul.f32 %v277, 1.442695
        %v282 = vpow.pop %v281
        %v283 = vmul.f32 %v278, 1.442695
        %v284 = vpow.pop %v283
        %v285 = vmul.f32 %v279, 1.442695
        %v286 = vpow.pop %v285
        %v287 = vmul.f32 %v280, 1.442695
        %v288 = vpow.pop %v287
        %v289 = vmul.f32 %v282, %v270
        %v290 = vmul.f32 %v284, %v271
        %v291 = vmul.f32 %v286, %v272
        %v292 = vmul.f32 %v288, %v273
        %v293 = vadd.f32 %v289, %v290
        %v294 = vadd.f32 %v293, %v291
        %v295 = vadd.f32 %v294, %v292
        %v296 = vadd.f32 %v282, %v284
        %v297 = vadd.f32 %v296, %v286
        %v298 = vadd.f32 %v297, %v288
        %v299 = vrcp.pop %v298
        %v300 = vmul.f32 %v295, %v299
        %v301 = vadd.f32 %v270, %v271
        %v302 = vadd.f32 %v301, %v272
        %v303 = vadd.f32 %v302, %v273
        %v304 = vadd.f32 %v300, 0.0
        %305 = vst [vmem:[%s254] sm:$0xff] %v304
        %v306 = vadd.f32 %v303, 0.0
        %307 = vst [vmem:[%s261] sm:$0xff] %v306
        %s308 = sand.u32 %s105, 1
        %s309 = scalar_lea.sflag [#allocation4], %s308
        %s310 = sand.u32 %s105, 1
        %s311 = smul.addr %s310, 8
        %s312 = scalar_lea.vmem [#allocation7], %s311
        %s313 = sand.u32 %s133, 1
        %s314 = scalar_lea.sflag [#allocation9], %s313
        %s315 = sand.u32 %s133, 1
        %s316 = smul.addr %s315, 8
        %s317 = scalar_lea.vmem [#allocation8], %s316
        // Predicated region
        $region37: #{tpu_custom_call.1} parent=27 // pred_check
          %p318 = pneg %p115
        $region38: #{tpu_custom_call.1} parent=27 // pred_check_branch
          %320 = sbr.rel (%p318) target = $region40
        $region39: #{tpu_custom_call.1} parent=27 // pred_region
          %s322 = ssub.s32 128, 128
          %323 = vsyncadd %s309, %s322
          %s324 = sadd.s32 %s32, %s31
          %s325 = smul.addr %s324, 128
          %s326 = scalar_lea.hbm %s2, %s325
          %s328 = sshll.u32 %s312, 4
          %s329 = int_to_ptr.vmem [resolvable:$true] %s328
          %331 = dma.vmem_to_hbm [thread:$0]  %s329, 128, %s326, %s309
        $region40: #{tpu_custom_call.1} parent=27 // pred_fallthru
          _
        // Predicated region
        $region41: #{tpu_custom_call.1} parent=27 // pred_check
          %p332 = pneg %p143
        $region42: #{tpu_custom_call.1} parent=27 // pred_check_branch
          %334 = sbr.rel (%p332) target = $region44
        $region43: #{tpu_custom_call.1} parent=27 // pred_region
          %s336 = ssub.s32 128, 128
          %337 = vsyncadd %s314, %s336
          %s338 = sadd.s32 %s32, %s31
          %s339 = smul.addr %s338, 128
          %s340 = scalar_lea.hbm %s3, %s339
          %s342 = sshll.u32 %s317, 4
          %s343 = int_to_ptr.vmem [resolvable:$true] %s342
          %345 = dma.vmem_to_hbm [thread:$0]  %s343, 128, %s340, %s314
        $region44: #{tpu_custom_call.1} parent=27 // pred_fallthru
          _
      $region28: #{tpu_custom_call.1} parent=5 // pred_fallthru
        _
      %p346 = scmp.le.s32.totalorder 2, %s22
      // Predicated region
      $region45: #{tpu_custom_call.1} parent=5 // pred_check
        %p347 = pneg %p346
      $region46: #{tpu_custom_call.1} parent=5 // pred_check_branch
        %349 = sbr.rel (%p347) target = $region48
      $region47: #{tpu_custom_call.1} parent=5 // pred_region
        %s350 = ssub.s32 %s22, 2
        // Predicated region
        $region49: #{tpu_custom_call.1} parent=47 // pred_check
          %p351 = pneg %p121
        $region50: #{tpu_custom_call.1} parent=47 // pred_check_branch
          %353 = sbr.rel (%p351) target = $region52
        $region51: #{tpu_custom_call.1} parent=47 // pred_region
          %s354 = sand.u32 %s106, 1
          %s355 = scalar_lea.sflag [#allocation4], %s354
          %s356 = sand.u32 %s106, 1
          %s357 = smul.addr %s356, 8
          %s358 = scalar_lea.vmem [#allocation7], %s357
          %359 = dma.done %s355, 128
        $region52: #{tpu_custom_call.1} parent=47 // pred_fallthru
          _
        // Predicated region
        $region53: #{tpu_custom_call.1} parent=47 // pred_check
          %p360 = pneg %p149
        $region54: #{tpu_custom_call.1} parent=47 // pred_check_branch
          %362 = sbr.rel (%p360) target = $region56
        $region55: #{tpu_custom_call.1} parent=47 // pred_region
          %s363 = sand.u32 %s134, 1
          %s364 = scalar_lea.sflag [#allocation9], %s363
          %s365 = sand.u32 %s134, 1
          %s366 = smul.addr %s365, 8
          %s367 = scalar_lea.vmem [#allocation8], %s366
          %368 = dma.done %s364, 128
        $region56: #{tpu_custom_call.1} parent=47 // pred_fallthru
          _
      $region48: #{tpu_custom_call.1} parent=5 // pred_fallthru
        _
    $region6: #{tpu_custom_call.1} parent=1 // loop_footer
      %s26 = sadd.s32 1, %s22
    $region7: #{tpu_custom_call.1} parent=1 // loop_footer_branch
      %21 = sbr.rel target = $region3
    $region8: #{tpu_custom_call.1} parent=1 // loop_exit
      _
    %369 = vsyncpa [#allocation3], 1
    %s370 = scalar_lea.sflag [#allocation3], 1
    %371 = vsyncpa %s370, 1
    %372 = vsyncpa [#allocation6], 1
    %s373 = scalar_lea.sflag [#allocation6], 1
    %374 = vsyncpa %s373, 1
    %375 = vsyncpa [#allocation4], 1
    %s376 = scalar_lea.sflag [#allocation4], 1
    %377 = vsyncpa %s376, 1
    %378 = vsyncpa [#allocation9], 1
    %s379 = scalar_lea.sflag [#allocation9], 1
    %380 = vsyncpa %s379, 1

</llo_original>
